<compile_context>
chip_gen: v5e
topology: v5e:2x2
jax: 0.10.0
libtpu: 0.0.40
codegen_flags: <defaults>
</compile_context>

<pallas_src>
import jax
import jax.numpy as jnp
from jax import lax
from jax.experimental import pallas as pl
from jax.experimental.pallas import tpu as pltpu


def _l2_normalize(x):
    # torch: y / y.norm(dim=-1, keepdim=True)  (no epsilon, matching PyTorch).
    # rsqrt issues on the EUP slot instead of a VPU divide.
    return x * lax.rsqrt(jnp.sum(x * x, axis=-1, keepdims=True))


def make_transformer_kernel(B: int, S: int, D: int, num_layers: int):
    """Kernel body; B/S/D/num_layers are compile-time constants."""
    BS = B * S

    def kernel(tok_ref, scal_ref, enc_ref, wqk_ref, wp_ref, o_ref, x_sc):
        # ---- fused embedding gather: x = encoder[tokens] --------------------
        # tok_ref : SMEM (B*S,) int32   enc_ref : VMEM (V, 1, D) float32
        for i in range(BS):                       # static unroll, 16 rows
            t = tok_ref[i]                        # scalar token id from SMEM
            x_sc[pl.ds(i, 1), :] = enc_ref[t]     # dynamic row load -> (1, D)

        alpha = scal_ref[0]                       # scalar from SMEM
        bias = scal_ref[1]
        wqk = wqk_ref[...]                        # (D, 2D); beta folded into Q half

        x = _l2_normalize(x_sc[...]).reshape(B, S, D)

        # ---- num_layers shared SimpleAttention layers (statically unrolled) -
        for _ in range(num_layers):
            x2 = x.reshape(BS, D)
            # fused Q/K projection: one (BS, D) @ (D, 2D) matmul
            qk = jnp.dot(x2, wqk, preferred_element_type=jnp.float32)
            q = qk[:, :D].reshape(B, S, D)        # already scaled by beta
            k = qk[:, D:].reshape(B, S, D)
            s = jnp.einsum('bqe,bke->bqk', q, k,
                           preferred_element_type=jnp.float32)      # (B,S,S)
            s = s - jnp.max(s, axis=-1, keepdims=True)
            e = jnp.exp(s)
            inv = pl.reciprocal(jnp.sum(e, axis=-1, keepdims=True), approx=True)
            # value weight is the frozen identity  =>  v = alpha * x,
            # fold alpha into the (smaller) attention-weight tensor.
            a = (alpha * e) * inv
            att = jnp.einsum('bqk,bkd->bqd', a, x,
                             preferred_element_type=jnp.float32)
            x = _l2_normalize(att + x)            # residual + L2-normalize

        pooled = jnp.mean(x, axis=1)              # (B, D) mean over sequence
        # proj(d -> 1): VPU multiply + lane reduction instead of a transposed
        # 1-wide MXU matmul.
        logits = jnp.sum(pooled * wp_ref[...], axis=-1, keepdims=True) + bias
        o_ref[...] = jax.nn.sigmoid(logits)       # (B, 1)

    return kernel


def custom_transformer_forward(tokens, params, *, num_layers: int, beta: float):
    """tokens: (B, S) int32.  Returns (B,) float32 (sigmoid probs)."""
    B, S = tokens.shape
    V, D = params["encoder"].shape

    # Weight plumbing (folds once per call, constant-folds under jit):
    #  - beta folded into the query weight,
    #  - Q/K fused into one (D, 2D) weight,
    #  - identity value weight dropped entirely,
    #  - alpha / bias packed into one tiny SMEM scalar array.
    wqk = jnp.concatenate([(beta * params["wq"]).T, params["wk"].T], axis=1)
    enc3 = params["encoder"].reshape(V, 1, D)      # leading-axis row gather
    scalars = jnp.concatenate(
        [params["alpha"].reshape(1), params["bias"].reshape(1)]
    ).astype(jnp.float32)
    tok_flat = tokens.reshape(B * S).astype(jnp.int32)

    flops = num_layers * (2 * B * S * D * 2 * D + 2 * 2 * B * S * S * D) + 2 * B * D
    cost = pl.CostEstimate(
        flops=flops,
        transcendentals=num_layers * B * S * S + B,
        bytes_accessed=4 * (tok_flat.size + scalars.size + enc3.size
                            + wqk.size + params["wp"].size + B),
    )

    kernel = make_transformer_kernel(B, S, D, num_layers)
    out = pl.pallas_call(
        kernel,
        out_shape=jax.ShapeDtypeStruct((B, 1), jnp.float32),
        in_specs=[
            pl.BlockSpec(memory_space=pltpu.SMEM),   # token ids
            pl.BlockSpec(memory_space=pltpu.SMEM),   # [alpha, bias]
            pl.BlockSpec(memory_space=pltpu.VMEM),   # encoder table (V,1,D)
            pl.BlockSpec(memory_space=pltpu.VMEM),   # fused Q/K weight (D,2D)
            pl.BlockSpec(memory_space=pltpu.VMEM),   # wp (1,D)
        ],
        out_specs=pl.BlockSpec(memory_space=pltpu.VMEM),
        scratch_shapes=[pltpu.VMEM((B * S, D), jnp.float32)],   # gathered x
        compiler_params=pltpu.CompilerParams(vmem_limit_bytes=32 * 1024 * 1024),
        cost_estimate=cost,
    )(tok_flat, scalars, enc3, wqk, params["wp"])
    return jnp.squeeze(out, axis=-1)                # torch .squeeze() -> (B,)


def reference_forward(tokens, params, *, num_layers: int, beta: float):
    """Pure-JAX reference mirroring the PyTorch forward (explicit identity V)."""
    x = params["encoder"][tokens]
    x = x / jnp.linalg.norm(x, axis=-1, keepdims=True)
    wv = jnp.eye(params["encoder"].shape[1], dtype=jnp.float32)  # value='identity'
    for _ in range(num_layers):
        q = x @ params["wq"].T
        k = x @ params["wk"].T
        v = params["alpha"] * (x @ wv.T)
        s = jnp.einsum('bqe,bke->bqk', q, k)
        a = jax.nn.softmax(beta * s, axis=-1)
        y = jnp.einsum('bqk,bkd->bqd', a, v) + x
        x = y / jnp.linalg.norm(y, axis=-1, keepdims=True)
    pooled = jnp.mean(x, axis=1)
    logits = pooled @ params["wp"].T + params["bias"]
    return jnp.squeeze(jax.nn.sigmoid(logits), axis=-1)


def init_params(key, num_words: int, d: int):
    """Deterministic synthetic parameters (share=True, value='identity')."""
    k_enc, k_q, k_k, k_a, k_p, k_b = jax.random.split(key, 6)
    return {
        "encoder": jax.random.normal(k_enc, (num_words, d), jnp.float32),
        "wq": jax.random.normal(k_q, (d, d), jnp.float32) / jnp.sqrt(d),
        "wk": jax.random.normal(k_k, (d, d), jnp.float32) / jnp.sqrt(d),
        "alpha": jax.random.normal(k_a, (1,), jnp.float32),   # value='identity'
        "wp": jax.random.normal(k_p, (1, d), jnp.float32) / jnp.sqrt(d),
        "bias": jax.random.normal(k_b, (1,), jnp.float32) * 0.1,
    }


if __name__ == "__main__":
    NUM_WORDS = 50
    D = 32
    NUM_LAYERS = 2
    BETA = 1.0
    B, S = 2, 8

    key = jax.random.PRNGKey(0)
    k_params, k_tok = jax.random.split(key)
    params = init_params(k_params, NUM_WORDS, D)
    tokens = jax.random.randint(k_tok, (B, S), 0, NUM_WORDS, dtype=jnp.int32)

    fwd = jax.jit(
        lambda t: custom_transformer_forward(t, params,
                                             num_layers=NUM_LAYERS, beta=BETA))
    out = jax.block_until_ready(fwd(tokens))

    ref = reference_forward(tokens, params, num_layers=NUM_LAYERS, beta=BETA)
    assert out.shape == (B,)
    # Kernel uses EUP approx reciprocal / rsqrt -> slightly looser tolerance
    # than an exact-f32 comparison.
    assert jnp.allclose(out, ref, atol=5e-3, rtol=5e-3), (out, ref)

    print("KERNEL_OK")
</pallas_src>

<mosaic_0001>
module attributes {stable_mosaic.version = 11 : i64} {
  func.func @kernel(%arg0: memref<16xi32, #tpu.memory_space<smem>>, %arg1: memref<2xf32, #tpu.memory_space<smem>>, %arg2: memref<50x1x32xf32, #tpu.memory_space<vmem>>, %arg3: memref<32x64xf32, #tpu.memory_space<vmem>>, %arg4: memref<1x32xf32, #tpu.memory_space<vmem>>, %arg5: memref<2x1xf32, #tpu.memory_space<vmem>>, %arg6: memref<16x32xf32, #tpu.memory_space<vmem>>) attributes {dimension_semantics = [], scalar_prefetch = 0 : i64, scratch_operands = 1 : i64, tpu.core_type = #tpu.core_type<tc>} {
    %c0 = arith.constant 0 : index
    %0 = memref.load %arg0[%c0] : memref<16xi32, #tpu.memory_space<smem>>
    %1 = arith.index_cast %0 : i32 to index
    %c0_0 = arith.constant 0 : index
    %c0_1 = arith.constant 0 : index
    %2 = vector.load %arg2[%1, %c0_0, %c0_1] : memref<50x1x32xf32, #tpu.memory_space<vmem>>, vector<1x1x32xf32>
    %3 = vector.shape_cast %2 : vector<1x1x32xf32> to vector<1x32xf32>
    %c0_2 = arith.constant 0 : index
    %c0_3 = arith.constant 0 : index
    %4 = vector.load %arg6[%c0_2, %c0_3] : memref<16x32xf32, #tpu.memory_space<vmem>>, vector<1x32xf32>
    tpu.vector_store %arg6[%c0_2, %c0_3], %3 {strides = array<i32>} : memref<16x32xf32, #tpu.memory_space<vmem>>, vector<1x32xf32>,
    %c1 = arith.constant 1 : index
    %5 = memref.load %arg0[%c1] : memref<16xi32, #tpu.memory_space<smem>>
    %6 = arith.index_cast %5 : i32 to index
    %c0_4 = arith.constant 0 : index
    %c0_5 = arith.constant 0 : index
    %7 = vector.load %arg2[%6, %c0_4, %c0_5] : memref<50x1x32xf32, #tpu.memory_space<vmem>>, vector<1x1x32xf32>
    %8 = vector.shape_cast %7 : vector<1x1x32xf32> to vector<1x32xf32>
    %c1_6 = arith.constant 1 : index
    %c0_7 = arith.constant 0 : index
    %9 = vector.load %arg6[%c1_6, %c0_7] : memref<16x32xf32, #tpu.memory_space<vmem>>, vector<1x32xf32>
    tpu.vector_store %arg6[%c1_6, %c0_7], %8 {strides = array<i32>} : memref<16x32xf32, #tpu.memory_space<vmem>>, vector<1x32xf32>,
    %c2 = arith.constant 2 : index
    %10 = memref.load %arg0[%c2] : memref<16xi32, #tpu.memory_space<smem>>
    %11 = arith.index_cast %10 : i32 to index
    %c0_8 = arith.constant 0 : index
    %c0_9 = arith.constant 0 : index
    %12 = vector.load %arg2[%11, %c0_8, %c0_9] : memref<50x1x32xf32, #tpu.memory_space<vmem>>, vector<1x1x32xf32>
    %13 = vector.shape_cast %12 : vector<1x1x32xf32> to vector<1x32xf32>
    %c2_10 = arith.constant 2 : index
    %c0_11 = arith.constant 0 : index
    %14 = vector.load %arg6[%c2_10, %c0_11] : memref<16x32xf32, #tpu.memory_space<vmem>>, vector<1x32xf32>
    tpu.vector_store %arg6[%c2_10, %c0_11], %13 {strides = array<i32>} : memref<16x32xf32, #tpu.memory_space<vmem>>, vector<1x32xf32>,
    %c3 = arith.constant 3 : index
    %15 = memref.load %arg0[%c3] : memref<16xi32, #tpu.memory_space<smem>>
    %16 = arith.index_cast %15 : i32 to index
    %c0_12 = arith.constant 0 : index
    %c0_13 = arith.constant 0 : index
    %17 = vector.load %arg2[%16, %c0_12, %c0_13] : memref<50x1x32xf32, #tpu.memory_space<vmem>>, vector<1x1x32xf32>
    %18 = vector.shape_cast %17 : vector<1x1x32xf32> to vector<1x32xf32>
    %c3_14 = arith.constant 3 : index
    %c0_15 = arith.constant 0 : index
    %19 = vector.load %arg6[%c3_14, %c0_15] : memref<16x32xf32, #tpu.memory_space<vmem>>, vector<1x32xf32>
    tpu.vector_store %arg6[%c3_14, %c0_15], %18 {strides = array<i32>} : memref<16x32xf32, #tpu.memory_space<vmem>>, vector<1x32xf32>,
    %c4 = arith.constant 4 : index
    %20 = memref.load %arg0[%c4] : memref<16xi32, #tpu.memory_space<smem>>
    %21 = arith.index_cast %20 : i32 to index
    %c0_16 = arith.constant 0 : index
    %c0_17 = arith.constant 0 : index
    %22 = vector.load %arg2[%21, %c0_16, %c0_17] : memref<50x1x32xf32, #tpu.memory_space<vmem>>, vector<1x1x32xf32>
    %23 = vector.shape_cast %22 : vector<1x1x32xf32> to vector<1x32xf32>
    %c4_18 = arith.constant 4 : index
    %c0_19 = arith.constant 0 : index
    %24 = vector.load %arg6[%c4_18, %c0_19] : memref<16x32xf32, #tpu.memory_space<vmem>>, vector<1x32xf32>
    tpu.vector_store %arg6[%c4_18, %c0_19], %23 {strides = array<i32>} : memref<16x32xf32, #tpu.memory_space<vmem>>, vector<1x32xf32>,
    %c5 = arith.constant 5 : index
    %25 = memref.load %arg0[%c5] : memref<16xi32, #tpu.memory_space<smem>>
    %26 = arith.index_cast %25 : i32 to index
    %c0_20 = arith.constant 0 : index
    %c0_21 = arith.constant 0 : index
    %27 = vector.load %arg2[%26, %c0_20, %c0_21] : memref<50x1x32xf32, #tpu.memory_space<vmem>>, vector<1x1x32xf32>
    %28 = vector.shape_cast %27 : vector<1x1x32xf32> to vector<1x32xf32>
    %c5_22 = arith.constant 5 : index
    %c0_23 = arith.constant 0 : index
    %29 = vector.load %arg6[%c5_22, %c0_23] : memref<16x32xf32, #tpu.memory_space<vmem>>, vector<1x32xf32>
    tpu.vector_store %arg6[%c5_22, %c0_23], %28 {strides = array<i32>} : memref<16x32xf32, #tpu.memory_space<vmem>>, vector<1x32xf32>,
    %c6 = arith.constant 6 : index
    %30 = memref.load %arg0[%c6] : memref<16xi32, #tpu.memory_space<smem>>
    %31 = arith.index_cast %30 : i32 to index
    %c0_24 = arith.constant 0 : index
    %c0_25 = arith.constant 0 : index
    %32 = vector.load %arg2[%31, %c0_24, %c0_25] : memref<50x1x32xf32, #tpu.memory_space<vmem>>, vector<1x1x32xf32>
    %33 = vector.shape_cast %32 : vector<1x1x32xf32> to vector<1x32xf32>
    %c6_26 = arith.constant 6 : index
    %c0_27 = arith.constant 0 : index
    %34 = vector.load %arg6[%c6_26, %c0_27] : memref<16x32xf32, #tpu.memory_space<vmem>>, vector<1x32xf32>
    tpu.vector_store %arg6[%c6_26, %c0_27], %33 {strides = array<i32>} : memref<16x32xf32, #tpu.memory_space<vmem>>, vector<1x32xf32>,
    %c7 = arith.constant 7 : index
    %35 = memref.load %arg0[%c7] : memref<16xi32, #tpu.memory_space<smem>>
    %36 = arith.index_cast %35 : i32 to index
    %c0_28 = arith.constant 0 : index
    %c0_29 = arith.constant 0 : index
    %37 = vector.load %arg2[%36, %c0_28, %c0_29] : memref<50x1x32xf32, #tpu.memory_space<vmem>>, vector<1x1x32xf32>
    %38 = vector.shape_cast %37 : vector<1x1x32xf32> to vector<1x32xf32>
    %c7_30 = arith.constant 7 : index
    %c0_31 = arith.constant 0 : index
    %39 = vector.load %arg6[%c7_30, %c0_31] : memref<16x32xf32, #tpu.memory_space<vmem>>, vector<1x32xf32>
    tpu.vector_store %arg6[%c7_30, %c0_31], %38 {strides = array<i32>} : memref<16x32xf32, #tpu.memory_space<vmem>>, vector<1x32xf32>,
    %c8 = arith.constant 8 : index
    %40 = memref.load %arg0[%c8] : memref<16xi32, #tpu.memory_space<smem>>
    %41 = arith.index_cast %40 : i32 to index
    %c0_32 = arith.constant 0 : index
    %c0_33 = arith.constant 0 : index
    %42 = vector.load %arg2[%41, %c0_32, %c0_33] : memref<50x1x32xf32, #tpu.memory_space<vmem>>, vector<1x1x32xf32>
    %43 = vector.shape_cast %42 : vector<1x1x32xf32> to vector<1x32xf32>
    %c8_34 = arith.constant 8 : index
    %c0_35 = arith.constant 0 : index
    %44 = vector.load %arg6[%c8_34, %c0_35] : memref<16x32xf32, #tpu.memory_space<vmem>>, vector<1x32xf32>
    tpu.vector_store %arg6[%c8_34, %c0_35], %43 {strides = array<i32>} : memref<16x32xf32, #tpu.memory_space<vmem>>, vector<1x32xf32>,
    %c9 = arith.constant 9 : index
    %45 = memref.load %arg0[%c9] : memref<16xi32, #tpu.memory_space<smem>>
    %46 = arith.index_cast %45 : i32 to index
    %c0_36 = arith.constant 0 : index
    %c0_37 = arith.constant 0 : index
    %47 = vector.load %arg2[%46, %c0_36, %c0_37] : memref<50x1x32xf32, #tpu.memory_space<vmem>>, vector<1x1x32xf32>
    %48 = vector.shape_cast %47 : vector<1x1x32xf32> to vector<1x32xf32>
    %c9_38 = arith.constant 9 : index
    %c0_39 = arith.constant 0 : index
    %49 = vector.load %arg6[%c9_38, %c0_39] : memref<16x32xf32, #tpu.memory_space<vmem>>, vector<1x32xf32>
    tpu.vector_store %arg6[%c9_38, %c0_39], %48 {strides = array<i32>} : memref<16x32xf32, #tpu.memory_space<vmem>>, vector<1x32xf32>,
    %c10 = arith.constant 10 : index
    %50 = memref.load %arg0[%c10] : memref<16xi32, #tpu.memory_space<smem>>
    %51 = arith.index_cast %50 : i32 to index
    %c0_40 = arith.constant 0 : index
    %c0_41 = arith.constant 0 : index
    %52 = vector.load %arg2[%51, %c0_40, %c0_41] : memref<50x1x32xf32, #tpu.memory_space<vmem>>, vector<1x1x32xf32>
    %53 = vector.shape_cast %52 : vector<1x1x32xf32> to vector<1x32xf32>
    %c10_42 = arith.constant 10 : index
    %c0_43 = arith.constant 0 : index
    %54 = vector.load %arg6[%c10_42, %c0_43] : memref<16x32xf32, #tpu.memory_space<vmem>>, vector<1x32xf32>
    tpu.vector_store %arg6[%c10_42, %c0_43], %53 {strides = array<i32>} : memref<16x32xf32, #tpu.memory_space<vmem>>, vector<1x32xf32>,
    %c11 = arith.constant 11 : index
    %55 = memref.load %arg0[%c11] : memref<16xi32, #tpu.memory_space<smem>>
    %56 = arith.index_cast %55 : i32 to index
    %c0_44 = arith.constant 0 : index
    %c0_45 = arith.constant 0 : index
    %57 = vector.load %arg2[%56, %c0_44, %c0_45] : memref<50x1x32xf32, #tpu.memory_space<vmem>>, vector<1x1x32xf32>
    %58 = vector.shape_cast %57 : vector<1x1x32xf32> to vector<1x32xf32>
    %c11_46 = arith.constant 11 : index
    %c0_47 = arith.constant 0 : index
    %59 = vector.load %arg6[%c11_46, %c0_47] : memref<16x32xf32, #tpu.memory_space<vmem>>, vector<1x32xf32>
    tpu.vector_store %arg6[%c11_46, %c0_47], %58 {strides = array<i32>} : memref<16x32xf32, #tpu.memory_space<vmem>>, vector<1x32xf32>,
    %c12 = arith.constant 12 : index
    %60 = memref.load %arg0[%c12] : memref<16xi32, #tpu.memory_space<smem>>
    %61 = arith.index_cast %60 : i32 to index
    %c0_48 = arith.constant 0 : index
    %c0_49 = arith.constant 0 : index
    %62 = vector.load %arg2[%61, %c0_48, %c0_49] : memref<50x1x32xf32, #tpu.memory_space<vmem>>, vector<1x1x32xf32>
    %63 = vector.shape_cast %62 : vector<1x1x32xf32> to vector<1x32xf32>
    %c12_50 = arith.constant 12 : index
    %c0_51 = arith.constant 0 : index
    %64 = vector.load %arg6[%c12_50, %c0_51] : memref<16x32xf32, #tpu.memory_space<vmem>>, vector<1x32xf32>
    tpu.vector_store %arg6[%c12_50, %c0_51], %63 {strides = array<i32>} : memref<16x32xf32, #tpu.memory_space<vmem>>, vector<1x32xf32>,
    %c13 = arith.constant 13 : index
    %65 = memref.load %arg0[%c13] : memref<16xi32, #tpu.memory_space<smem>>
    %66 = arith.index_cast %65 : i32 to index
    %c0_52 = arith.constant 0 : index
    %c0_53 = arith.constant 0 : index
    %67 = vector.load %arg2[%66, %c0_52, %c0_53] : memref<50x1x32xf32, #tpu.memory_space<vmem>>, vector<1x1x32xf32>
    %68 = vector.shape_cast %67 : vector<1x1x32xf32> to vector<1x32xf32>
    %c13_54 = arith.constant 13 : index
    %c0_55 = arith.constant 0 : index
    %69 = vector.load %arg6[%c13_54, %c0_55] : memref<16x32xf32, #tpu.memory_space<vmem>>, vector<1x32xf32>
    tpu.vector_store %arg6[%c13_54, %c0_55], %68 {strides = array<i32>} : memref<16x32xf32, #tpu.memory_space<vmem>>, vector<1x32xf32>,
    %c14 = arith.constant 14 : index
    %70 = memref.load %arg0[%c14] : memref<16xi32, #tpu.memory_space<smem>>
    %71 = arith.index_cast %70 : i32 to index
    %c0_56 = arith.constant 0 : index
    %c0_57 = arith.constant 0 : index
    %72 = vector.load %arg2[%71, %c0_56, %c0_57] : memref<50x1x32xf32, #tpu.memory_space<vmem>>, vector<1x1x32xf32>
    %73 = vector.shape_cast %72 : vector<1x1x32xf32> to vector<1x32xf32>
    %c14_58 = arith.constant 14 : index
    %c0_59 = arith.constant 0 : index
    %74 = vector.load %arg6[%c14_58, %c0_59] : memref<16x32xf32, #tpu.memory_space<vmem>>, vector<1x32xf32>
    tpu.vector_store %arg6[%c14_58, %c0_59], %73 {strides = array<i32>} : memref<16x32xf32, #tpu.memory_space<vmem>>, vector<1x32xf32>,
    %c15 = arith.constant 15 : index
    %75 = memref.load %arg0[%c15] : memref<16xi32, #tpu.memory_space<smem>>
    %76 = arith.index_cast %75 : i32 to index
    %c0_60 = arith.constant 0 : index
    %c0_61 = arith.constant 0 : index
    %77 = vector.load %arg2[%76, %c0_60, %c0_61] : memref<50x1x32xf32, #tpu.memory_space<vmem>>, vector<1x1x32xf32>
    %78 = vector.shape_cast %77 : vector<1x1x32xf32> to vector<1x32xf32>
    %c15_62 = arith.constant 15 : index
    %c0_63 = arith.constant 0 : index
    %79 = vector.load %arg6[%c15_62, %c0_63] : memref<16x32xf32, #tpu.memory_space<vmem>>, vector<1x32xf32>
    tpu.vector_store %arg6[%c15_62, %c0_63], %78 {strides = array<i32>} : memref<16x32xf32, #tpu.memory_space<vmem>>, vector<1x32xf32>,
    %c0_64 = arith.constant 0 : index
    %80 = memref.load %arg1[%c0_64] : memref<2xf32, #tpu.memory_space<smem>>
    %c1_65 = arith.constant 1 : index
    %81 = memref.load %arg1[%c1_65] : memref<2xf32, #tpu.memory_space<smem>>
    %c0_66 = arith.constant 0 : index
    %c0_67 = arith.constant 0 : index
    %82 = vector.load %arg3[%c0_66, %c0_67] : memref<32x64xf32, #tpu.memory_space<vmem>>, vector<32x64xf32>
    %c0_68 = arith.constant 0 : index
    %c0_69 = arith.constant 0 : index
    %83 = vector.load %arg6[%c0_68, %c0_69] : memref<16x32xf32, #tpu.memory_space<vmem>>, vector<16x32xf32>
    %84 = arith.mulf %83, %83 : vector<16x32xf32>
    %cst = arith.constant dense<0.000000e+00> : vector<16xf32>
    %85 = vector.multi_reduction <add>, %84, %cst [1] : vector<16x32xf32> to vector<16xf32>
    %86 = vector.shape_cast %85 : vector<16xf32> to vector<16x1xf32>
    %87 = math.rsqrt %86 : vector<16x1xf32>
    %88 = vector.broadcast %87 : vector<16x1xf32> to vector<16x32xf32>
    %89 = arith.mulf %83, %88 : vector<16x32xf32>
    %90 = vector.shape_cast %89 : vector<16x32xf32> to vector<2x8x32xf32>
    %91 = vector.shape_cast %90 : vector<2x8x32xf32> to vector<16x32xf32>
    %cst_70 = arith.constant dense<0.000000e+00> : vector<16x64xf32>
    %92 = tpu.matmul %91, %82, %cst_70 {dimension_numbers = #tpu.dot_dimension_numbers<[1], [0], [0], [1], [0, 0, 1, 1], [], []>} : vector<16x32xf32>, vector<32x64xf32>, vector<16x64xf32> -> vector<16x64xf32>
    %93 = vector.extract_strided_slice %92 {offsets = [0, 0], sizes = [16, 32], strides = [1, 1]} : vector<16x64xf32> to vector<16x32xf32>
    %94 = vector.shape_cast %93 : vector<16x32xf32> to vector<2x8x32xf32>
    %95 = vector.extract_strided_slice %92 {offsets = [0, 32], sizes = [16, 32], strides = [1, 1]} : vector<16x64xf32> to vector<16x32xf32>
    %96 = vector.shape_cast %95 : vector<16x32xf32> to vector<2x8x32xf32>
    "tpu.trace_start"() <{level = 10 : i32, message = "bqe,bke->bqk"}> : () -> ()
    %cst_71 = arith.constant dense<0.000000e+00> : vector<2x8x8xf32>
    %97 = tpu.matmul %94, %96, %cst_71 {dimension_numbers = #tpu.dot_dimension_numbers<[2], [2], [1], [1], [0, 0, 0, 1, 1, 1], [0], [0]>} : vector<2x8x32xf32>, vector<2x8x32xf32>, vector<2x8x8xf32> -> vector<2x8x8xf32>
    "tpu.trace_stop"() : () -> ()
    %cst_72 = arith.constant dense<0xFF800000> : vector<2x8xf32>
    %98 = vector.multi_reduction <maximumf>, %97, %cst_72 [2] : vector<2x8x8xf32> to vector<2x8xf32>
    %99 = vector.shape_cast %98 : vector<2x8xf32> to vector<2x8x1xf32>
    %100 = vector.broadcast %99 : vector<2x8x1xf32> to vector<2x8x8xf32>
    %101 = arith.subf %97, %100 : vector<2x8x8xf32>
    %102 = math.exp %101 : vector<2x8x8xf32>
    %cst_73 = arith.constant dense<0.000000e+00> : vector<2x8xf32>
    %103 = vector.multi_reduction <add>, %102, %cst_73 [2] : vector<2x8x8xf32> to vector<2x8xf32>
    %104 = vector.shape_cast %103 : vector<2x8xf32> to vector<2x8x1xf32>
    %105 = tpu.reciprocal %104 {approx = true} : vector<2x8x1xf32> -> vector<2x8x1xf32>
    %106 = vector.broadcast %80 : f32 to vector<2x8x8xf32>
    %107 = arith.mulf %106, %102 : vector<2x8x8xf32>
    %108 = vector.broadcast %105 : vector<2x8x1xf32> to vector<2x8x8xf32>
    %109 = arith.mulf %107, %108 : vector<2x8x8xf32>
    "tpu.trace_start"() <{level = 10 : i32, message = "bqk,bkd->bqd"}> : () -> ()
    %cst_74 = arith.constant dense<0.000000e+00> : vector<2x8x32xf32>
    %110 = tpu.matmul %109, %90, %cst_74 {dimension_numbers = #tpu.dot_dimension_numbers<[2], [1], [1], [2], [0, 0, 0, 1, 1, 2], [0], [0]>} : vector<2x8x8xf32>, vector<2x8x32xf32>, vector<2x8x32xf32> -> vector<2x8x32xf32>
    "tpu.trace_stop"() : () -> ()
    %111 = arith.addf %110, %90 : vector<2x8x32xf32>
    %112 = arith.mulf %111, %111 : vector<2x8x32xf32>
    %cst_75 = arith.constant dense<0.000000e+00> : vector<2x8xf32>
    %113 = vector.multi_reduction <add>, %112, %cst_75 [2] : vector<2x8x32xf32> to vector<2x8xf32>
    %114 = vector.shape_cast %113 : vector<2x8xf32> to vector<2x8x1xf32>
    %115 = math.rsqrt %114 : vector<2x8x1xf32>
    %116 = vector.broadcast %115 : vector<2x8x1xf32> to vector<2x8x32xf32>
    %117 = arith.mulf %111, %116 : vector<2x8x32xf32>
    %118 = vector.shape_cast %117 : vector<2x8x32xf32> to vector<16x32xf32>
    %cst_76 = arith.constant dense<0.000000e+00> : vector<16x64xf32>
    %119 = tpu.matmul %118, %82, %cst_76 {dimension_numbers = #tpu.dot_dimension_numbers<[1], [0], [0], [1], [0, 0, 1, 1], [], []>} : vector<16x32xf32>, vector<32x64xf32>, vector<16x64xf32> -> vector<16x64xf32>
    %120 = vector.extract_strided_slice %119 {offsets = [0, 0], sizes = [16, 32], strides = [1, 1]} : vector<16x64xf32> to vector<16x32xf32>
    %121 = vector.shape_cast %120 : vector<16x32xf32> to vector<2x8x32xf32>
    %122 = vector.extract_strided_slice %119 {offsets = [0, 32], sizes = [16, 32], strides = [1, 1]} : vector<16x64xf32> to vector<16x32xf32>
    %123 = vector.shape_cast %122 : vector<16x32xf32> to vector<2x8x32xf32>
    "tpu.trace_start"() <{level = 10 : i32, message = "bqe,bke->bqk"}> : () -> ()
    %cst_77 = arith.constant dense<0.000000e+00> : vector<2x8x8xf32>
    %124 = tpu.matmul %121, %123, %cst_77 {dimension_numbers = #tpu.dot_dimension_numbers<[2], [2], [1], [1], [0, 0, 0, 1, 1, 1], [0], [0]>} : vector<2x8x32xf32>, vector<2x8x32xf32>, vector<2x8x8xf32> -> vector<2x8x8xf32>
    "tpu.trace_stop"() : () -> ()
    %cst_78 = arith.constant dense<0xFF800000> : vector<2x8xf32>
    %125 = vector.multi_reduction <maximumf>, %124, %cst_78 [2] : vector<2x8x8xf32> to vector<2x8xf32>
    %126 = vector.shape_cast %125 : vector<2x8xf32> to vector<2x8x1xf32>
    %127 = vector.broadcast %126 : vector<2x8x1xf32> to vector<2x8x8xf32>
    %128 = arith.subf %124, %127 : vector<2x8x8xf32>
    %129 = math.exp %128 : vector<2x8x8xf32>
    %cst_79 = arith.constant dense<0.000000e+00> : vector<2x8xf32>
    %130 = vector.multi_reduction <add>, %129, %cst_79 [2] : vector<2x8x8xf32> to vector<2x8xf32>
    %131 = vector.shape_cast %130 : vector<2x8xf32> to vector<2x8x1xf32>
    %132 = tpu.reciprocal %131 {approx = true} : vector<2x8x1xf32> -> vector<2x8x1xf32>
    %133 = vector.broadcast %80 : f32 to vector<2x8x8xf32>
    %134 = arith.mulf %133, %129 : vector<2x8x8xf32>
    %135 = vector.broadcast %132 : vector<2x8x1xf32> to vector<2x8x8xf32>
    %136 = arith.mulf %134, %135 : vector<2x8x8xf32>
    "tpu.trace_start"() <{level = 10 : i32, message = "bqk,bkd->bqd"}> : () -> ()
    %cst_80 = arith.constant dense<0.000000e+00> : vector<2x8x32xf32>
    %137 = tpu.matmul %136, %117, %cst_80 {dimension_numbers = #tpu.dot_dimension_numbers<[2], [1], [1], [2], [0, 0, 0, 1, 1, 2], [0], [0]>} : vector<2x8x8xf32>, vector<2x8x32xf32>, vector<2x8x32xf32> -> vector<2x8x32xf32>
    "tpu.trace_stop"() : () -> ()
    %138 = arith.addf %137, %117 : vector<2x8x32xf32>
    %139 = arith.mulf %138, %138 : vector<2x8x32xf32>
    %cst_81 = arith.constant dense<0.000000e+00> : vector<2x8xf32>
    %140 = vector.multi_reduction <add>, %139, %cst_81 [2] : vector<2x8x32xf32> to vector<2x8xf32>
    %141 = vector.shape_cast %140 : vector<2x8xf32> to vector<2x8x1xf32>
    %142 = math.rsqrt %141 : vector<2x8x1xf32>
    %143 = vector.broadcast %142 : vector<2x8x1xf32> to vector<2x8x32xf32>
    %144 = arith.mulf %138, %143 : vector<2x8x32xf32>
    %cst_82 = arith.constant dense<0.000000e+00> : vector<2x32xf32>
    %145 = vector.multi_reduction <add>, %144, %cst_82 [1] : vector<2x8x32xf32> to vector<2x32xf32>
    %cst_83 = arith.constant 8.000000e+00 : f32
    %146 = vector.broadcast %cst_83 : f32 to vector<2x32xf32>
    %147 = arith.divf %145, %146 : vector<2x32xf32>
    %c0_84 = arith.constant 0 : index
    %c0_85 = arith.constant 0 : index
    %148 = vector.load %arg4[%c0_84, %c0_85] : memref<1x32xf32, #tpu.memory_space<vmem>>, vector<1x32xf32>
    %149 = vector.broadcast %148 : vector<1x32xf32> to vector<2x32xf32>
    %150 = arith.mulf %147, %149 : vector<2x32xf32>
    %cst_86 = arith.constant dense<0.000000e+00> : vector<2xf32>
    %151 = vector.multi_reduction <add>, %150, %cst_86 [1] : vector<2x32xf32> to vector<2xf32>
    %152 = vector.shape_cast %151 : vector<2xf32> to vector<2x1xf32>
    %153 = vector.broadcast %81 : f32 to vector<2x1xf32>
    %154 = arith.addf %152, %153 : vector<2x1xf32>
    %155 = arith.negf %154 : vector<2x1xf32>
    %156 = math.exp %155 : vector<2x1xf32>
    %cst_87 = arith.constant 1.000000e+00 : f32
    %157 = vector.broadcast %cst_87 : f32 to vector<2x1xf32>
    %158 = arith.addf %157, %156 : vector<2x1xf32>
    %159 = arith.divf %157, %158 : vector<2x1xf32>
    %c0_88 = arith.constant 0 : index
    %c0_89 = arith.constant 0 : index
    %160 = vector.load %arg5[%c0_88, %c0_89] : memref<2x1xf32, #tpu.memory_space<vmem>>, vector<2x1xf32>
    tpu.vector_store %arg5[%c0_88, %c0_89], %159 {strides = array<i32>} : memref<2x1xf32, #tpu.memory_space<vmem>>, vector<2x1xf32>,
    return
  }
}

</mosaic_0001>

<llo_original>
// kernel: _lambda_.1
$region0: #{_lambda_.1}
  #allocation0 [shape = 'u32[]', space=smem, size = 0x4, offset = 0x4, fixed_abs, tag = 'smem constant byte address 0x4 - core index']
  #allocation1 [shape = 'u32[72,128]{1,0:T(1,128)}', space=vmem, size = 0x9000, scoped, tag = 'internal scratch']
  #allocation2 [shape = 'f32[16,32]{1,0:T(8,128)}', space=vmem, size = 0x2000, scoped, tag = 'scratch operand']
  %s0 = inlined_call_operand.vmem [shape: s32[16], index: 0, kind: input, shape index: {}]
  %s1 = inlined_call_operand.vmem [shape: f32[2], index: 1, kind: input, shape index: {}]
  %s2 = inlined_call_operand.hbm [shape: f32[50,1,32], index: 2, kind: input, shape index: {}]
  %s3 = inlined_call_operand.hbm [shape: f32[32,64], index: 3, kind: input, shape index: {}]
  %s4 = inlined_call_operand.vmem [shape: f32[1,32], index: 4, kind: input, shape index: {}]
  %s5 = inlined_call_operand.vmem [shape: f32[2,1], index: 5, kind: output, shape index: {}]
  %s6 = sld [smem:[#allocation0]]
  $region46: #{_lambda_.1} parent=0
    _
  %s8 = ssub.s32 1, %s6
  %s9 = scalar_select 0, %s8, %s6
  $region1: #{_lambda_.1} parent=0
    #allocation3 [shape = 'u8[512]{0}', space=smem, size = 0x200, scoped, tag = 'input window, operand 0, single buffered']
    #allocation4 [shape = 's32[1]{0}', space=sflag, size = 0x4, scoped, tag = 'scoped memory for _lambda_.1']
    #allocation5 [shape = 's32[1]{0}', space=sflag, size = 0x4, scoped, tag = 'scoped memory for _lambda_.1']
    #allocation6 [shape = 'u8[512]{0}', space=smem, size = 0x200, scoped, tag = 'input window, operand 1, single buffered']
    #allocation7 [shape = 's32[1]{0}', space=sflag, size = 0x4, scoped, tag = 'scoped memory for _lambda_.1']
    #allocation8 [shape = 'u8[25600]{0}', space=vmem, size = 0x6400, scoped, tag = 'input window, operand 2, single buffered']
    #allocation9 [shape = 'u8[16384]{0}', space=vmem, size = 0x4000, scoped, tag = 'input window, operand 3, single buffered']
    #allocation10 [shape = 's32[1]{0}', space=sflag, size = 0x4, scoped, tag = 'scoped memory for _lambda_.1']
    %10 = vsyncpa [#allocation5], 0
    %11 = vsyncpa [#allocation7], 0
    %12 = vsyncpa [#allocation4], 0
    %13 = vsyncpa [#allocation10], 0
    // Predicated region
    $region2: #{_lambda_.1} parent=1 // pred_check
      _
    $region3: #{_lambda_.1} parent=1 // pred_check_branch
      %15 = sbr.rel (0) target = $region5
    $region4: #{_lambda_.1} parent=1 // pred_region
      %17 = vsyncadd [#allocation5], 0
      %s19 = sshll.u32 %s0, 4
      %s20 = int_to_ptr.vmem [resolvable:$true] %s19
      %22 = dma.vmem_to_smem %s20, 16, [#allocation3], [#allocation5]
    $region5: #{_lambda_.1} parent=1 // pred_fallthru
      _
    // Predicated region
    $region6: #{_lambda_.1} parent=1 // pred_check
      _
    $region7: #{_lambda_.1} parent=1 // pred_check_branch
      %24 = sbr.rel (0) target = $region9
    $region8: #{_lambda_.1} parent=1 // pred_region
      %26 = vsyncadd [#allocation7], 0
      %s28 = sshll.u32 %s1, 4
      %s29 = int_to_ptr.vmem [resolvable:$true] %s28
      %31 = dma.vmem_to_smem %s29, 16, [#allocation6], [#allocation7]
    $region9: #{_lambda_.1} parent=1 // pred_fallthru
      _
    // Predicated region
    $region10: #{_lambda_.1} parent=1 // pred_check
      _
    $region11: #{_lambda_.1} parent=1 // pred_check_branch
      %33 = sbr.rel (0) target = $region13
    $region12: #{_lambda_.1} parent=1 // pred_region
      %35 = vsyncadd [#allocation4], 0
      %s36 = sshll.u32 %s2, 4
      %s37 = int_to_ptr.hbm [resolvable:$true] %s36
      %s38 = sshll.u32 [#allocation8], 4
      %s39 = int_to_ptr.vmem [resolvable:$true] %s38
      %44 = dma.hbm_to_vmem [thread:$0]  %s37, 800, %s39, [#allocation4], 16, 16, 1
    $region13: #{_lambda_.1} parent=1 // pred_fallthru
      _
    // Predicated region
    $region14: #{_lambda_.1} parent=1 // pred_check
      _
    $region15: #{_lambda_.1} parent=1 // pred_check_branch
      %46 = sbr.rel (0) target = $region17
    $region16: #{_lambda_.1} parent=1 // pred_region
      %48 = vsyncadd [#allocation10], 0
      %s49 = sshll.u32 %s3, 4
      %s50 = int_to_ptr.hbm [resolvable:$true] %s49
      %s51 = sshll.u32 [#allocation9], 4
      %s52 = int_to_ptr.vmem [resolvable:$true] %s51
      %57 = dma.hbm_to_vmem [thread:$0]  %s50, 512, %s52, [#allocation10], 128, 128, 8
    $region17: #{_lambda_.1} parent=1 // pred_fallthru
      _
    // Predicated region
    $region18: #{_lambda_.1} parent=1 // pred_check
      _
    $region19: #{_lambda_.1} parent=1 // pred_check_branch
      %59 = sbr.rel (0) target = $region21
    $region20: #{_lambda_.1} parent=1 // pred_region
      _
    $region21: #{_lambda_.1} parent=1 // pred_fallthru
      _
    // Predicated region
    $region22: #{_lambda_.1} parent=1 // pred_check
      _
    $region23: #{_lambda_.1} parent=1 // pred_check_branch
      %61 = sbr.rel (0) target = $region25
    $region24: #{_lambda_.1} parent=1 // pred_region
      %63 = dma.done [#allocation5], 16
    $region25: #{_lambda_.1} parent=1 // pred_fallthru
      _
    // Predicated region
    $region26: #{_lambda_.1} parent=1 // pred_check
      _
    $region27: #{_lambda_.1} parent=1 // pred_check_branch
      %65 = sbr.rel (0) target = $region29
    $region28: #{_lambda_.1} parent=1 // pred_region
      %67 = dma.done [#allocation7], 16
    $region29: #{_lambda_.1} parent=1 // pred_fallthru
      _
    // Predicated region
    $region30: #{_lambda_.1} parent=1 // pred_check
      _
    $region31: #{_lambda_.1} parent=1 // pred_check_branch
      %69 = sbr.rel (0) target = $region33
    $region32: #{_lambda_.1} parent=1 // pred_region
      %71 = dma.done [#allocation4], 800
    $region33: #{_lambda_.1} parent=1 // pred_fallthru
      _
    // Predicated region
    $region34: #{_lambda_.1} parent=1 // pred_check
      _
    $region35: #{_lambda_.1} parent=1 // pred_check_branch
      %73 = sbr.rel (0) target = $region37
    $region36: #{_lambda_.1} parent=1 // pred_region
      %75 = dma.done [#allocation10], 512
    $region37: #{_lambda_.1} parent=1 // pred_fallthru
      _
    %76 = sfence
    %s77 = sld [smem:[#allocation3]]
    %s78 = scalar_lea.vmem [#allocation8], %s77
    %v79 = vld [vmem:[%s78] sm:$0x1]
    %vm80 = vcmask 253952
    %81 = vst.msk [vmem:[#allocation2] sm:$0x1] %vm80, %v79
    %s82 = sld [smem:[#allocation3 + $0x1]]
    %s83 = scalar_lea.vmem [#allocation8], %s82
    %v84 = vld [vmem:[%s83] sm:$0x1]
    %85 = vst.msk [vmem:[#allocation2 + $0x1] sm:$0x1] %vm80, %v84
    %s86 = sld [smem:[#allocation3 + $0x2]]
    %s87 = scalar_lea.vmem [#allocation8], %s86
    %v88 = vld [vmem:[%s87] sm:$0x1]
    %89 = vst.msk [vmem:[#allocation2 + $0x2] sm:$0x1] %vm80, %v88
    %s90 = sld [smem:[#allocation3 + $0x3]]
    %s91 = scalar_lea.vmem [#allocation8], %s90
    %v92 = vld [vmem:[%s91] sm:$0x1]
    %93 = vst.msk [vmem:[#allocation2 + $0x3] sm:$0x1] %vm80, %v92
    %s94 = sld [smem:[#allocation3 + $0x4]]
    %s95 = scalar_lea.vmem [#allocation8], %s94
    %v96 = vld [vmem:[%s95] sm:$0x1]
    %97 = vst.msk [vmem:[#allocation2 + $0x4] sm:$0x1] %vm80, %v96
    %s98 = sld [smem:[#allocation3 + $0x5]]
    %s99 = scalar_lea.vmem [#allocation8], %s98
    %v100 = vld [vmem:[%s99] sm:$0x1]
    %101 = vst.msk [vmem:[#allocation2 + $0x5] sm:$0x1] %vm80, %v100
    %s102 = sld [smem:[#allocation3 + $0x6]]
    %s103 = scalar_lea.vmem [#allocation8], %s102
    %v104 = vld [vmem:[%s103] sm:$0x1]
    %105 = vst.msk [vmem:[#allocation2 + $0x6] sm:$0x1] %vm80, %v104
    %s106 = sld [smem:[#allocation3 + $0x7]]
    %s107 = scalar_lea.vmem [#allocation8], %s106
    %v108 = vld [vmem:[%s107] sm:$0x1]
    %109 = vst.msk [vmem:[#allocation2 + $0x7] sm:$0x1] %vm80, %v108
    %s110 = sld [smem:[#allocation3 + $0x8]]
    %s111 = scalar_lea.vmem [#allocation8], %s110
    %v112 = vld [vmem:[%s111] sm:$0x1]
    %113 = vst.msk [vmem:[#allocation2 + $0x8] sm:$0x1] %vm80, %v112
    %s114 = sld [smem:[#allocation3 + $0x9]]
    %s115 = scalar_lea.vmem [#allocation8], %s114
    %v116 = vld [vmem:[%s115] sm:$0x1]
    %117 = vst.msk [vmem:[#allocation2 + $0x9] sm:$0x1] %vm80, %v116
    %s118 = sld [smem:[#allocation3 + $0xa]]
    %s119 = scalar_lea.vmem [#allocation8], %s118
    %v120 = vld [vmem:[%s119] sm:$0x1]
    %121 = vst.msk [vmem:[#allocation2 + $0xa] sm:$0x1] %vm80, %v120
    %s122 = sld [smem:[#allocation3 + $0xb]]
    %s123 = scalar_lea.vmem [#allocation8], %s122
    %v124 = vld [vmem:[%s123] sm:$0x1]
    %125 = vst.msk [vmem:[#allocation2 + $0xb] sm:$0x1] %vm80, %v124
    %s126 = sld [smem:[#allocation3 + $0xc]]
    %s127 = scalar_lea.vmem [#allocation8], %s126
    %v128 = vld [vmem:[%s127] sm:$0x1]
    %129 = vst.msk [vmem:[#allocation2 + $0xc] sm:$0x1] %vm80, %v128
    %s130 = sld [smem:[#allocation3 + $0xd]]
    %s131 = scalar_lea.vmem [#allocation8], %s130
    %v132 = vld [vmem:[%s131] sm:$0x1]
    %133 = vst.msk [vmem:[#allocation2 + $0xd] sm:$0x1] %vm80, %v132
    %s134 = sld [smem:[#allocation3 + $0xe]]
    %s135 = scalar_lea.vmem [#allocation8], %s134
    %v136 = vld [vmem:[%s135] sm:$0x1]
    %137 = vst.msk [vmem:[#allocation2 + $0xe] sm:$0x1] %vm80, %v136
    %s138 = sld [smem:[#allocation3 + $0xf]]
    %s139 = scalar_lea.vmem [#allocation8], %s138
    %v140 = vld [vmem:[%s139] sm:$0x1]
    %141 = vst.msk [vmem:[#allocation2 + $0xf] sm:$0x1] %vm80, %v140
    %s142 = sld [smem:[#allocation6]]
    %s143 = sld [smem:[#allocation6 + $0x1]]
    %v144 = vld [vmem:[#allocation9] sm:$0xff]
    %v145 = vld [vmem:[#allocation9 + $0x8] sm:$0xff]
    %v146 = vld [vmem:[#allocation9 + $0x10] sm:$0xff]
    %v147 = vld [vmem:[#allocation9 + $0x18] sm:$0xff]
    %v148 = vld [vmem:[#allocation2] sm:$0xff]
    %v149 = vld [vmem:[#allocation2 + $0x8] sm:$0xff]
    %v150 = vmul.f32 %v148, %v148
    %v151 = vmul.f32 %v149, %v149
    %vm152 = vcmask 261120
    %v153 = vsel %vm152, %v150, 0.0
    %154 = vadd.xlane.f32.xlu0 %v153
    %v155 = vpop.xlane.xlu0 %154
    %v156 = vsel %vm152, %v151, 0.0
    %157 = vadd.xlane.f32.xlu0 %v156
    %v158 = vpop.xlane.xlu0 %157
    %v159 = vrsqrt.pop %v155
    %v160 = vmul.f32 %v159, %v155
    %v161 = vmul.f32 %v160, %v159
    %v162 = vmul.f32 0.5, %v161
    %v163 = vsub.f32 1.5, %v162
    %v164 = vmul.f32 %v159, %v163
    %vm165 = vweird.f32 %v155
    %vm166 = vweird.f32 %v159
    %vm167 = vmor %vm165, %vm166
    %v168 = vsel %vm167, %v159, %v164
    %v169 = vrsqrt.pop %v158
    %v170 = vmul.f32 %v169, %v158
    %v171 = vmul.f32 %v170, %v169
    %v172 = vmul.f32 0.5, %v171
    %v173 = vsub.f32 1.5, %v172
    %v174 = vmul.f32 %v169, %v173
    %vm175 = vweird.f32 %v158
    %vm176 = vweird.f32 %v169
    %vm177 = vmor %vm175, %vm176
    %v178 = vsel %vm177, %v169, %v174
    %v179 = vmul.f32 %v148, %v168
    %v180 = vmul.f32 %v149, %v178
    %v182 = vsel %vm152, %v179, 0
    %v185 = vsel %vm152, %v180, 0
    %187 = vmatpush.msra.mxu0 0.0
    %188 = vmatpush.msra.mxu0 0.0
    %189 = vmatpush.msra.mxu0 0.0
    %190 = vmatpush.msra.mxu0 0.0
    %191 = vmatpush.msra.mxu0 0.0
    %192 = vmatpush.msra.mxu0 0.0
    %193 = vmatpush.msra.mxu0 0.0
    %194 = vmatpush.msra.mxu0 0.0
    %195 = vmatpush.msra.mxu0 0.0
    %196 = vmatpush.msra.mxu0 0.0
    %197 = vmatpush.msra.mxu0 0.0
    %198 = vmatpush.msra.mxu0 0.0
    %199 = vmatpush.msra.mxu0 %v147
    %200 = vmatpush.msra.mxu0 %v146
    %201 = vmatpush.msra.mxu0 %v145
    %202 = vmatpush.msra.mxu0 %v144
    %203 = vmatmul.f32.gmra.mxu0 %v182
    %v204 = vpop.f32.mrf.mxu0
    %v205 = vadd.f32 0.0, %v204
    %206 = vmatmul.f32.gmra.mxu0 %v185
    %v207 = vpop.f32.mrf.mxu0
    %v208 = vadd.f32 0.0, %v207
    %209 = vdwg.mxu0
    %211 = vrot.lane.b32.xlu0 %v205, 96
    %v212 = vpop.permute.xlu0 %211
    %v213 = vsel %vm152, %v205, 0
    %v215 = vsel %vm152, %v212, 0
    %217 = vmatpush.xpose.msra.mxu0 0.0
    %218 = vmatpush.xpose.msra.mxu0 0.0
    %219 = vmatpush.xpose.msra.mxu0 0.0
    %220 = vmatpush.xpose.msra.mxu0 0.0
    %221 = vmatpush.xpose.msra.mxu0 0.0
    %222 = vmatpush.xpose.msra.mxu0 0.0
    %223 = vmatpush.xpose.msra.mxu0 0.0
    %224 = vmatpush.xpose.msra.mxu0 0.0
    %225 = vmatpush.xpose.msra.mxu0 0.0
    %226 = vmatpush.xpose.msra.mxu0 0.0
    %227 = vmatpush.xpose.msra.mxu0 0.0
    %228 = vmatpush.xpose.msra.mxu0 0.0
    %229 = vmatpush.xpose.msra.mxu0 0.0
    %230 = vmatpush.xpose.msra.mxu0 0.0
    %231 = vmatpush.xpose.msra.mxu0 0.0
    %232 = vmatpush.xpose.msra.mxu0 %v215
    %233 = vmatmul.f32.gmra.mxu0 %v213
    %v234 = vpop.f32.mrf.mxu0
    %v235 = vadd.f32 0.0, %v234
    %236 = vdwg.mxu0
    %238 = vrot.lane.b32.xlu0 %v208, 96
    %v239 = vpop.permute.xlu0 %238
    %v240 = vsel %vm152, %v208, 0
    %v242 = vsel %vm152, %v239, 0
    %244 = vmatpush.xpose.msra.mxu0 0.0
    %245 = vmatpush.xpose.msra.mxu0 0.0
    %246 = vmatpush.xpose.msra.mxu0 0.0
    %247 = vmatpush.xpose.msra.mxu0 0.0
    %248 = vmatpush.xpose.msra.mxu0 0.0
    %249 = vmatpush.xpose.msra.mxu0 0.0
    %250 = vmatpush.xpose.msra.mxu0 0.0
    %251 = vmatpush.xpose.msra.mxu0 0.0
    %252 = vmatpush.xpose.msra.mxu0 0.0
    %253 = vmatpush.xpose.msra.mxu0 0.0
    %254 = vmatpush.xpose.msra.mxu0 0.0
    %255 = vmatpush.xpose.msra.mxu0 0.0
    %256 = vmatpush.xpose.msra.mxu0 0.0
    %257 = vmatpush.xpose.msra.mxu0 0.0
    %258 = vmatpush.xpose.msra.mxu0 0.0
    %259 = vmatpush.xpose.msra.mxu0 %v242
    %260 = vmatmul.f32.gmra.mxu0 %v240
    %v261 = vpop.f32.mrf.mxu0
    %v262 = vadd.f32 0.0, %v261
    %263 = vdwg.mxu0
    %vm264 = vcmask 64512
    %v265 = vsel %vm264, %v235, -inf
    %266 = vmax.xlane.f32.xlu0 %v265
    %v267 = vpop.xlane.xlu0 %266
    %v268 = vsel %vm264, %v262, -inf
    %269 = vmax.xlane.f32.xlu0 %v268
    %v270 = vpop.xlane.xlu0 %269
    %v271 = vsub.f32 %v235, %v267
    %v272 = vsub.f32 %v262, %v270
    %v273 = vmul.f32 %v271, 1.442695
    %v274 = vpow.pop %v273
    %v275 = vmul.f32 %v272, 1.442695
    %v276 = vpow.pop %v275
    %v277 = vsel %vm264, %v274, 0.0
    %278 = vadd.xlane.f32.xlu0 %v277
    %v279 = vpop.xlane.xlu0 %278
    %v280 = vsel %vm264, %v276, 0.0
    %281 = vadd.xlane.f32.xlu0 %v280
    %v282 = vpop.xlane.xlu0 %281
    %v283 = vrcp.pop %v279
    %v284 = vrcp.pop %v282
    %v285 = vstv %s142
    %v286 = vmul.f32 %v285, %v274
    %v287 = vmul.f32 %v285, %v276
    %v288 = vmul.f32 %v286, %v283
    %v289 = vmul.f32 %v287, %v284
    %v291 = vsel %vm264, %v288, 0
    %293 = vmatpush.msra.mxu0 0.0
    %294 = vmatpush.msra.mxu0 0.0
    %295 = vmatpush.msra.mxu0 0.0
    %296 = vmatpush.msra.mxu0 0.0
    %297 = vmatpush.msra.mxu0 0.0
    %298 = vmatpush.msra.mxu0 0.0
    %299 = vmatpush.msra.mxu0 0.0
    %300 = vmatpush.msra.mxu0 0.0
    %301 = vmatpush.msra.mxu0 0.0
    %302 = vmatpush.msra.mxu0 0.0
    %303 = vmatpush.msra.mxu0 0.0
    %304 = vmatpush.msra.mxu0 0.0
    %305 = vmatpush.msra.mxu0 0.0
    %306 = vmatpush.msra.mxu0 0.0
    %307 = vmatpush.msra.mxu0 0.0
    %308 = vmatpush.msra.mxu0 %v179
    %309 = vmatmul.f32.gmra.mxu0 %v291
    %v310 = vpop.f32.mrf.mxu0
    %v311 = vadd.f32 %v179, %v310
    %312 = vdwg.mxu0
    %v314 = vsel %vm264, %v289, 0
    %316 = vmatpush.msra.mxu0 0.0
    %317 = vmatpush.msra.mxu0 0.0
    %318 = vmatpush.msra.mxu0 0.0
    %319 = vmatpush.msra.mxu0 0.0
    %320 = vmatpush.msra.mxu0 0.0
    %321 = vmatpush.msra.mxu0 0.0
    %322 = vmatpush.msra.mxu0 0.0
    %323 = vmatpush.msra.mxu0 0.0
    %324 = vmatpush.msra.mxu0 0.0
    %325 = vmatpush.msra.mxu0 0.0
    %326 = vmatpush.msra.mxu0 0.0
    %327 = vmatpush.msra.mxu0 0.0
    %328 = vmatpush.msra.mxu0 0.0
    %329 = vmatpush.msra.mxu0 0.0
    %330 = vmatpush.msra.mxu0 0.0
    %331 = vmatpush.msra.mxu0 %v180
    %332 = vmatmul.f32.gmra.mxu0 %v314
    %v333 = vpop.f32.mrf.mxu0
    %v334 = vadd.f32 %v180, %v333
    %335 = vdwg.mxu0
    %v336 = vmul.f32 %v311, %v311
    %v337 = vmul.f32 %v334, %v334
    %v338 = vsel %vm152, %v336, 0.0
    %339 = vadd.xlane.f32.xlu0 %v338
    %v340 = vpop.xlane.xlu0 %339
    %v341 = vsel %vm152, %v337, 0.0
    %342 = vadd.xlane.f32.xlu0 %v341
    %v343 = vpop.xlane.xlu0 %342
    %v344 = vrsqrt.pop %v340
    %v345 = vmul.f32 %v344, %v340
    %v346 = vmul.f32 %v345, %v344
    %v347 = vmul.f32 0.5, %v346
    %v348 = vsub.f32 1.5, %v347
    %v349 = vmul.f32 %v344, %v348
    %vm350 = vweird.f32 %v340
    %vm351 = vweird.f32 %v344
    %vm352 = vmor %vm350, %vm351
    %v353 = vsel %vm352, %v344, %v349
    %v354 = vrsqrt.pop %v343
    %v355 = vmul.f32 %v354, %v343
    %v356 = vmul.f32 %v355, %v354
    %v357 = vmul.f32 0.5, %v356
    %v358 = vsub.f32 1.5, %v357
    %v359 = vmul.f32 %v354, %v358
    %vm360 = vweird.f32 %v343
    %vm361 = vweird.f32 %v354
    %vm362 = vmor %vm360, %vm361
    %v363 = vsel %vm362, %v354, %v359
    %v364 = vmul.f32 %v311, %v353
    %v365 = vmul.f32 %v334, %v363
    %v367 = vsel %vm152, %v364, 0
    %v370 = vsel %vm152, %v365, 0
    %372 = vmatpush.msra.mxu0 0.0
    %373 = vmatpush.msra.mxu0 0.0
    %374 = vmatpush.msra.mxu0 0.0
    %375 = vmatpush.msra.mxu0 0.0
    %376 = vmatpush.msra.mxu0 0.0
    %377 = vmatpush.msra.mxu0 0.0
    %378 = vmatpush.msra.mxu0 0.0
    %379 = vmatpush.msra.mxu0 0.0
    %380 = vmatpush.msra.mxu0 0.0
    %381 = vmatpush.msra.mxu0 0.0
    %382 = vmatpush.msra.mxu0 0.0
    %383 = vmatpush.msra.mxu0 0.0
    %384 = vmatpush.msra.mxu0 %v147
    %385 = vmatpush.msra.mxu0 %v146
    %386 = vmatpush.msra.mxu0 %v145
    %387 = vmatpush.msra.mxu0 %v144
    %388 = vmatmul.f32.gmra.mxu0 %v367
    %v389 = vpop.f32.mrf.mxu0
    %v390 = vadd.f32 0.0, %v389
    %391 = vmatmul.f32.gmra.mxu0 %v370
    %v392 = vpop.f32.mrf.mxu0
    %v393 = vadd.f32 0.0, %v392
    %394 = vdwg.mxu0
    %396 = vrot.lane.b32.xlu0 %v390, 96
    %v397 = vpop.permute.xlu0 %396
    %v398 = vsel %vm152, %v390, 0
    %v400 = vsel %vm152, %v397, 0
    %402 = vmatpush.xpose.msra.mxu0 0.0
    %403 = vmatpush.xpose.msra.mxu0 0.0
    %404 = vmatpush.xpose.msra.mxu0 0.0
    %405 = vmatpush.xpose.msra.mxu0 0.0
    %406 = vmatpush.xpose.msra.mxu0 0.0
    %407 = vmatpush.xpose.msra.mxu0 0.0
    %408 = vmatpush.xpose.msra.mxu0 0.0
    %409 = vmatpush.xpose.msra.mxu0 0.0
    %410 = vmatpush.xpose.msra.mxu0 0.0
    %411 = vmatpush.xpose.msra.mxu0 0.0
    %412 = vmatpush.xpose.msra.mxu0 0.0
    %413 = vmatpush.xpose.msra.mxu0 0.0
    %414 = vmatpush.xpose.msra.mxu0 0.0
    %415 = vmatpush.xpose.msra.mxu0 0.0
    %416 = vmatpush.xpose.msra.mxu0 0.0
    %417 = vmatpush.xpose.msra.mxu0 %v400
    %418 = vmatmul.f32.gmra.mxu0 %v398
    %v419 = vpop.f32.mrf.mxu0
    %v420 = vadd.f32 0.0, %v419
    %421 = vdwg.mxu0
    %423 = vrot.lane.b32.xlu0 %v393, 96
    %v424 = vpop.permute.xlu0 %423
    %v425 = vsel %vm152, %v393, 0
    %v427 = vsel %vm152, %v424, 0
    %429 = vmatpush.xpose.msra.mxu0 0.0
    %430 = vmatpush.xpose.msra.mxu0 0.0
    %431 = vmatpush.xpose.msra.mxu0 0.0
    %432 = vmatpush.xpose.msra.mxu0 0.0
    %433 = vmatpush.xpose.msra.mxu0 0.0
    %434 = vmatpush.xpose.msra.mxu0 0.0
    %435 = vmatpush.xpose.msra.mxu0 0.0
    %436 = vmatpush.xpose.msra.mxu0 0.0
    %437 = vmatpush.xpose.msra.mxu0 0.0
    %438 = vmatpush.xpose.msra.mxu0 0.0
    %439 = vmatpush.xpose.msra.mxu0 0.0
    %440 = vmatpush.xpose.msra.mxu0 0.0
    %441 = vmatpush.xpose.msra.mxu0 0.0
    %442 = vmatpush.xpose.msra.mxu0 0.0
    %443 = vmatpush.xpose.msra.mxu0 0.0
    %444 = vmatpush.xpose.msra.mxu0 %v427
    %445 = vmatmul.f32.gmra.mxu0 %v425
    %v446 = vpop.f32.mrf.mxu0
    %v447 = vadd.f32 0.0, %v446
    %448 = vdwg.mxu0
    %v449 = vsel %vm264, %v420, -inf
    %450 = vmax.xlane.f32.xlu0 %v449
    %v451 = vpop.xlane.xlu0 %450
    %v452 = vsel %vm264, %v447, -inf
    %453 = vmax.xlane.f32.xlu0 %v452
    %v454 = vpop.xlane.xlu0 %453
    %v455 = vsub.f32 %v420, %v451
    %v456 = vsub.f32 %v447, %v454
    %v457 = vmul.f32 %v455, 1.442695
    %v458 = vpow.pop %v457
    %v459 = vmul.f32 %v456, 1.442695
    %v460 = vpow.pop %v459
    %v461 = vsel %vm264, %v458, 0.0
    %462 = vadd.xlane.f32.xlu0 %v461
    %v463 = vpop.xlane.xlu0 %462
    %v464 = vsel %vm264, %v460, 0.0
    %465 = vadd.xlane.f32.xlu0 %v464
    %v466 = vpop.xlane.xlu0 %465
    %v467 = vrcp.pop %v463
    %v468 = vrcp.pop %v466
    %v469 = vmul.f32 %v285, %v458
    %v470 = vmul.f32 %v285, %v460
    %v471 = vmul.f32 %v469, %v467
    %v472 = vmul.f32 %v470, %v468
    %v474 = vsel %vm264, %v471, 0
    %476 = vmatpush.msra.mxu0 0.0
    %477 = vmatpush.msra.mxu0 0.0
    %478 = vmatpush.msra.mxu0 0.0
    %479 = vmatpush.msra.mxu0 0.0
    %480 = vmatpush.msra.mxu0 0.0
    %481 = vmatpush.msra.mxu0 0.0
    %482 = vmatpush.msra.mxu0 0.0
    %483 = vmatpush.msra.mxu0 0.0
    %484 = vmatpush.msra.mxu0 0.0
    %485 = vmatpush.msra.mxu0 0.0
    %486 = vmatpush.msra.mxu0 0.0
    %487 = vmatpush.msra.mxu0 0.0
    %488 = vmatpush.msra.mxu0 0.0
    %489 = vmatpush.msra.mxu0 0.0
    %490 = vmatpush.msra.mxu0 0.0
    %491 = vmatpush.msra.mxu0 %v364
    %492 = vmatmul.f32.gmra.mxu0 %v474
    %v493 = vpop.f32.mrf.mxu0
    %v494 = vadd.f32 %v364, %v493
    %495 = vdwg.mxu0
    %v497 = vsel %vm264, %v472, 0
    %499 = vmatpush.msra.mxu0 0.0
    %500 = vmatpush.msra.mxu0 0.0
    %501 = vmatpush.msra.mxu0 0.0
    %502 = vmatpush.msra.mxu0 0.0
    %503 = vmatpush.msra.mxu0 0.0
    %504 = vmatpush.msra.mxu0 0.0
    %505 = vmatpush.msra.mxu0 0.0
    %506 = vmatpush.msra.mxu0 0.0
    %507 = vmatpush.msra.mxu0 0.0
    %508 = vmatpush.msra.mxu0 0.0
    %509 = vmatpush.msra.mxu0 0.0
    %510 = vmatpush.msra.mxu0 0.0
    %511 = vmatpush.msra.mxu0 0.0
    %512 = vmatpush.msra.mxu0 0.0
    %513 = vmatpush.msra.mxu0 0.0
    %514 = vmatpush.msra.mxu0 %v365
    %515 = vmatmul.f32.gmra.mxu0 %v497
    %v516 = vpop.f32.mrf.mxu0
    %v517 = vadd.f32 %v365, %v516
    %518 = vdwg.mxu0
    %v519 = vmul.f32 %v494, %v494
    %v520 = vmul.f32 %v517, %v517
    %v521 = vsel %vm152, %v519, 0.0
    %522 = vadd.xlane.f32.xlu0 %v521
    %v523 = vpop.xlane.xlu0 %522
    %v524 = vsel %vm152, %v520, 0.0
    %525 = vadd.xlane.f32.xlu0 %v524
    %v526 = vpop.xlane.xlu0 %525
    %v527 = vrsqrt.pop %v523
    %v528 = vmul.f32 %v527, %v523
    %v529 = vmul.f32 %v528, %v527
    %v530 = vmul.f32 0.5, %v529
    %v531 = vsub.f32 1.5, %v530
    %v532 = vmul.f32 %v527, %v531
    %vm533 = vweird.f32 %v523
    %vm534 = vweird.f32 %v527
    %vm535 = vmor %vm533, %vm534
    %v536 = vsel %vm535, %v527, %v532
    %v537 = vrsqrt.pop %v526
    %v538 = vmul.f32 %v537, %v526
    %v539 = vmul.f32 %v538, %v537
    %v540 = vmul.f32 0.5, %v539
    %v541 = vsub.f32 1.5, %v540
    %v542 = vmul.f32 %v537, %v541
    %vm543 = vweird.f32 %v526
    %vm544 = vweird.f32 %v537
    %vm545 = vmor %vm543, %vm544
    %v546 = vsel %vm545, %v537, %v542
    %v547 = vmul.f32 %v494, %v536
    %v548 = vmul.f32 %v517, %v546
    %v549 = vsel %vm152, %v547, 0.0
    %v550 = vrot.slane %v549, 4
    %v551 = vadd.f32 %v549, %v550
    %v552 = vrot.slane %v551, 2
    %v553 = vadd.f32 %v551, %v552
    %v554 = vrot.slane %v553, 1
    %v555 = vadd.f32 %v553, %v554
    %v556 = vsel %vm152, %v548, 0.0
    %v557 = vrot.slane %v556, 4
    %v558 = vadd.f32 %v556, %v557
    %v559 = vrot.slane %v558, 2
    %v560 = vadd.f32 %v558, %v559
    %v561 = vrot.slane %v560, 1
    %v562 = vadd.f32 %v560, %v561
    %v563 = vrcp.pop 8.0
    %v564 = vmul.f32 8.0, %v563
    %v565 = vsub.f32 1.0, %v564
    %v566 = vmul.f32 %v563, %v565
    %v567 = vadd.f32 %v563, %v566
    %vm568 = vweird.f32 %v563
    %v569 = vsel %vm568, %v563, %v567
    %v570 = vmul.f32 %v555, %v569
    %v571 = vmul.f32 %v562, %v569
    %v572 = vld [vmem:[%s4] sm:$0x1]
    %v574 = vperm.slane %v572, 0
    %v576 = vmul.f32 %v570, %v574
    %v577 = vmul.f32 %v571, %v574
    %v580 = vrot.slane %v577, 7
    %vm581 = vcmask 1041409
    %v582 = vsel %vm581, %v580, %v576
    %vm584 = vcmask 254976
    %v585 = vsel %vm584, %v582, 0.0
    %586 = vadd.xlane.f32.xlu0 %v585
    %v587 = vpop.xlane.xlu0 %586
    %v588 = vstv %s143
    %v589 = vadd.f32 %v587, %v588
    %v590 = vxor.u32 %v589, 2147483648
    %v591 = vmul.f32 %v590, 1.442695
    %v592 = vpow.pop %v591
    %v593 = vadd.f32 %v592, 1.0
    %v594 = vrcp.pop %v593
    %v595 = vmul.f32 %v593, %v594
    %v596 = vsub.f32 1.0, %v595
    %v597 = vmul.f32 %v594, %v596
    %v598 = vadd.f32 %v594, %v597
    %vm599 = vweird.f32 %v593
    %vm600 = vweird.f32 %v594
    %vm601 = vmor %vm599, %vm600
    %v602 = vsel %vm601, %v594, %v598
    %v603 = vand.u32 2147483647, %v593
    %vm604 = vcmp.eq.f32.partialorder %v603, 8.507059e+37
    %v605 = vand.u32 %v593, 2147483648
    %v606 = vor.u32 1.1754944e-38, %v605
    %v607 = vsel %vm604, %v606, %v602
    %v608 = vmul.f32 1.0, %v607
    %vm609 = vcmask 1024
    %610 = vst.msk [vmem:[%s5] sm:$0x3] %vm609, %v608
    // Predicated region
    $region38: #{_lambda_.1} parent=1 // pred_check
      _
    $region39: #{_lambda_.1} parent=1 // pred_check_branch
      %612 = sbr.rel (0) target = $region41
    $region40: #{_lambda_.1} parent=1 // pred_region
      _
    $region41: #{_lambda_.1} parent=1 // pred_fallthru
      _
    // Predicated region
    $region42: #{_lambda_.1} parent=1 // pred_check
      _
    $region43: #{_lambda_.1} parent=1 // pred_check_branch
      %614 = sbr.rel (0) target = $region45
    $region44: #{_lambda_.1} parent=1 // pred_region
      _
    $region45: #{_lambda_.1} parent=1 // pred_fallthru
      _
    %615 = vsyncpa [#allocation4], 1
    %616 = vsyncpa [#allocation10], 1
    %617 = vsyncpa [#allocation5], 1
    %618 = vsyncpa [#allocation7], 1

</llo_original>
